<compile_context>
chip_gen: v5e
topology: v5e:2x2
jax: 0.10.0
libtpu: 0.0.40
codegen_flags: <defaults>
</compile_context>

<pallas_src>
import functools

import jax
import jax.numpy as jnp
from jax import lax
from jax.experimental import pallas as pl
from jax.experimental.pallas import tpu as pltpu


def _round_up(v: int, m: int) -> int:
    return (v + m - 1) // m * m


def _cdiv(a: int, b: int) -> int:
    return -(-a // b)


def _proto_kernel(*refs, normalize: bool, single_k: bool):
    """Grid point (i, j, k).

    Refs (in order):
      x_ref:   [tm, tk]  feature tile (native dtype)
      p_ref:   [tn, tk]  prototype tile (native dtype)
      rx_ref:  [tm, 1]   f32 1/max(||x_row||, eps)      (only if normalize)
      rp_ref:  [1, tn]   f32 1/max(||prototype||, eps)  (only if normalize)
      o_ref:   [tm, tn]  logits tile
      acc_ref: [tm, tn]  f32 VMEM accumulator            (only if not single_k)
    """
    if normalize:
        x_ref, p_ref, rx_ref, rp_ref, *rest = refs
    else:
        x_ref, p_ref, *rest = refs
        rx_ref = rp_ref = None
    if single_k:
        (o_ref,) = rest
        acc_ref = None
    else:
        o_ref, acc_ref = rest

    def _dot(a, b):
        # Contract the last dim of both operands (trans-B): no XLU transpose
        # of the prototype tile; MXU accumulates in f32.
        return lax.dot_general(
            a, b,
            dimension_numbers=(((1,), (1,)), ((), ())),
            preferred_element_type=jnp.float32)

    if single_k:
        out = _dot(x_ref[...], p_ref[...])
        if normalize:
            out = out * rx_ref[...] * rp_ref[...]
        o_ref[...] = out.astype(o_ref.dtype)
    else:
        k = pl.program_id(2)

        @pl.when(k == 0)
        def _init():
            acc_ref[...] = jnp.zeros_like(acc_ref)

        acc_ref[...] += _dot(x_ref[...], p_ref[...])

        @pl.when(k == pl.num_programs(2) - 1)
        def _finalize():
            out = acc_ref[...]
            if normalize:
                out = out * rx_ref[...] * rp_ref[...]
            o_ref[...] = out.astype(o_ref.dtype)


def prototypical_forward(x, prototypes, *, normalize=True,
                         prototypes_initialized=True,
                         max_tm=512, max_tn=512, max_tk=1024):
    """JAX wrapper mirroring PrototypicalClassifier.forward."""
    B, D = x.shape
    C, D2 = prototypes.shape
    assert D == D2, "feature dims must match"

    if not prototypes_initialized:
        # PyTorch returns torch.zeros (default f32) without touching
        # the prototypes parameter.
        return jnp.zeros((B, C), dtype=jnp.float32)

    out_dtype = jnp.result_type(x.dtype, prototypes.dtype)

    # ---- Adaptive, pad-minimizing tile selection --------------------------
    num_i = _cdiv(B, max_tm)
    num_j = _cdiv(C, max_tn)
    # v7x megacore: guarantee >= 2 output tiles when possible so both
    # TensorCores get an i-tile (costs one cheap extra grid step on
    # single-TC v5e/v6e).
    if num_i * num_j == 1 and B >= 16:
        num_i = 2
    tm = _round_up(_cdiv(B, num_i), 8)
    tn = _round_up(_cdiv(C, num_j), 128)

    num_k = _cdiv(D, max_tk)
    tk = _round_up(_cdiv(D, num_k), 128)
    Dp = num_k * tk
    single_k = (num_k == 1)

    # Only the contraction dim requires true zero padding.  M/C edges are
    # handled by Pallas partial blocks (garbage lanes land in rows/cols
    # that are never stored to the exact (B, C) output).
    if Dp != D:
        x_in = jnp.pad(x, ((0, 0), (0, Dp - D)))
        p_in = jnp.pad(prototypes, ((0, 0), (0, Dp - D)))
    else:
        x_in, p_in = x, prototypes

    grid = (num_i, num_j, num_k)

    in_specs = [
        pl.BlockSpec((tm, tk), lambda i, j, k: (i, k)),
        pl.BlockSpec((tn, tk), lambda i, j, k: (j, k)),
    ]
    inputs = [x_in, p_in]

    if normalize:
        # Hoisted L2-norm reductions (tiny fused XLA reduces, O(B*D + C*D)).
        # rsqrt(max(ss, eps^2)) == 1 / max(||v||, eps) -> exactly F.normalize.
        eps2 = jnp.float32(1e-24)
        rx = lax.rsqrt(jnp.maximum(
            jnp.sum(jnp.square(x.astype(jnp.float32)), axis=1, keepdims=True),
            eps2))                                              # (B, 1)
        rp = lax.rsqrt(jnp.maximum(
            jnp.sum(jnp.square(prototypes.astype(jnp.float32)), axis=1,
                    keepdims=True), eps2)).T                    # (1, C)
        in_specs += [
            pl.BlockSpec((tm, 1), lambda i, j, k: (i, 0)),
            pl.BlockSpec((1, tn), lambda i, j, k: (0, j)),
        ]
        inputs += [rx, rp]

    scratch_shapes = [] if single_k else [pltpu.VMEM((tm, tn), jnp.float32)]

    nbytes = lambda a: a.size * jnp.dtype(a.dtype).itemsize
    cost = pl.CostEstimate(
        flops=2 * B * C * Dp + (2 * B * C if normalize else 0),
        transcendentals=0,
        bytes_accessed=sum(nbytes(a) for a in inputs)
                       + B * C * jnp.dtype(out_dtype).itemsize,
    )

    kernel = functools.partial(_proto_kernel, normalize=normalize,
                               single_k=single_k)

    # NOTE: pipeline_mode=pl.Buffered(3) on the x/p specs is a cheap extra
    # lever for the HBM-bound single-j-tile case; left at the default depth
    # of 2 here to keep the VMEM budget generation-agnostic.
    return pl.pallas_call(
        kernel,
        out_shape=jax.ShapeDtypeStruct((B, C), out_dtype),
        grid_spec=pltpu.PrefetchScalarGridSpec(
            num_scalar_prefetch=0,
            grid=grid,
            in_specs=in_specs,
            out_specs=pl.BlockSpec((tm, tn), lambda i, j, k: (i, j)),
            scratch_shapes=scratch_shapes,
        ),
        compiler_params=pltpu.CompilerParams(
            dimension_semantics=("parallel", "parallel", "arbitrary"),
            # ~11 MiB worst case (512x512x1024 f32 tiles, double-buffered);
            # 32 MiB is within every generation's physical VMEM and above
            # v5e's 16 MiB scoped default.
            vmem_limit_bytes=32 * 1024 * 1024),
        cost_estimate=cost,
    )(*inputs)


def _reference(x, prototypes, normalize=True):
    """Pure-JAX reference (full f32 matmul precision) for correctness."""
    hp = jax.lax.Precision.HIGHEST
    if normalize:
        eps = 1e-12
        xn = x / jnp.maximum(jnp.linalg.norm(x, axis=1, keepdims=True), eps)
        pn = prototypes / jnp.maximum(
            jnp.linalg.norm(prototypes, axis=1, keepdims=True), eps)
        return jnp.matmul(xn, pn.T, precision=hp)
    return jnp.matmul(x, prototypes.T, precision=hp)


if __name__ == "__main__":
    # TODO(synk): update_prototypes / compute_prototypes are training-time
    # bookkeeping (data-dependent Python loops over labels); not part of the
    # forward hot path, so they are not implemented as a kernel.
    key = jax.random.PRNGKey(0)

    # ---- Test 1: small, module-consistent shapes (single-tile grid) ----
    B, D, C = 4, 32, 8
    kx, kp = jax.random.split(key)
    x = jax.random.normal(kx, (B, D), dtype=jnp.float32)
    prototypes = jax.random.normal(kp, (C, D), dtype=jnp.float32)

    # Uninitialized path (plain JAX, matches torch.zeros return).
    zeros_out = prototypical_forward(x, prototypes,
                                     prototypes_initialized=False)
    assert zeros_out.shape == (B, C) and float(jnp.abs(zeros_out).max()) == 0.0

    logits = jax.block_until_ready(
        prototypical_forward(x, prototypes, normalize=True))
    ref = _reference(x, prototypes, normalize=True)
    assert logits.shape == (B, C)
    assert jnp.allclose(logits, ref, atol=1e-4, rtol=1e-4), "norm mismatch"

    logits_nn = jax.block_until_ready(
        prototypical_forward(x, prototypes, normalize=False))
    ref_nn = _reference(x, prototypes, normalize=False)
    assert jnp.allclose(logits_nn, ref_nn, atol=5e-3, rtol=1e-4), "raw mismatch"

    # ---- Test 2: unaligned shapes -> partial edge blocks, D padding ----
    B2, D2_, C2 = 300, 600, 150
    kx2, kp2 = jax.random.split(jax.random.PRNGKey(1))
    x2 = jax.random.normal(kx2, (B2, D2_), dtype=jnp.float32)
    p2 = jax.random.normal(kp2, (C2, D2_), dtype=jnp.float32)

    out2 = jax.block_until_ready(
        prototypical_forward(x2, p2, normalize=True))
    ref2 = _reference(x2, p2, normalize=True)
    assert out2.shape == (B2, C2)
    assert jnp.allclose(out2, ref2, atol=1e-4, rtol=1e-4), "tiled norm mismatch"

    out2_nn = jax.block_until_ready(
        prototypical_forward(x2, p2, normalize=False))
    ref2_nn = _reference(x2, p2, normalize=False)
    assert jnp.allclose(out2_nn, ref2_nn, atol=5e-3, rtol=1e-4), \
        "tiled raw mismatch"

    # ---- Test 3: force a multi-K-tile grid (accumulator path) ----
    B3, D3, C3 = 64, 384, 130
    kx3, kp3 = jax.random.split(jax.random.PRNGKey(2))
    x3 = jax.random.normal(kx3, (B3, D3), dtype=jnp.float32)
    p3 = jax.random.normal(kp3, (C3, D3), dtype=jnp.float32)

    out3 = jax.block_until_ready(
        prototypical_forward(x3, p3, normalize=True, max_tk=128))
    ref3 = _reference(x3, p3, normalize=True)
    assert out3.shape == (B3, C3)
    assert jnp.allclose(out3, ref3, atol=1e-4, rtol=1e-4), "multi-K mismatch"

    print("KERNEL_OK")
</pallas_src>

<mosaic_0001>
module attributes {stable_mosaic.version = 11 : i64} {
  func.func @_proto_kernel(%arg0: i32, %arg1: i32, %arg2: i32, %arg3: memref<8x128xf32, #tpu.memory_space<vmem>>, %arg4: memref<128x128xf32, #tpu.memory_space<vmem>>, %arg5: memref<8x1xf32, #tpu.memory_space<vmem>>, %arg6: memref<1x128xf32, #tpu.memory_space<vmem>>, %arg7: memref<8x128xf32, #tpu.memory_space<vmem>>) attributes {dimension_semantics = [#tpu.dimension_semantics<parallel>, #tpu.dimension_semantics<parallel>, #tpu.dimension_semantics<arbitrary>], iteration_bounds = array<i64: 1, 1, 1>, scalar_prefetch = 0 : i64, scratch_operands = 0 : i64, tpu.core_type = #tpu.core_type<tc>, window_params = [{transform_indices = @transform_0, window_bounds = array<i64: 8, 128>}, {transform_indices = @transform_1, window_bounds = array<i64: 128, 128>}, {transform_indices = @transform_2, window_bounds = array<i64: 8, 1>}, {transform_indices = @transform_3, window_bounds = array<i64: 1, 128>}, {transform_indices = @transform_4, window_bounds = array<i64: 8, 128>}]} {
    %c0 = arith.constant 0 : index
    %c0_0 = arith.constant 0 : index
    %0 = vector.load %arg3[%c0, %c0_0] : memref<8x128xf32, #tpu.memory_space<vmem>>, vector<8x128xf32>
    %c0_1 = arith.constant 0 : index
    %c0_2 = arith.constant 0 : index
    %1 = vector.load %arg4[%c0_1, %c0_2] : memref<128x128xf32, #tpu.memory_space<vmem>>, vector<128x128xf32>
    %cst = arith.constant dense<0.000000e+00> : vector<8x128xf32>
    %2 = tpu.matmul %0, %1, %cst {dimension_numbers = #tpu.dot_dimension_numbers<[1], [1], [0], [0], [0, 0, 1, 0], [], []>} : vector<8x128xf32>, vector<128x128xf32>, vector<8x128xf32> -> vector<8x128xf32>
    %c0_3 = arith.constant 0 : index
    %c0_4 = arith.constant 0 : index
    %3 = vector.load %arg5[%c0_3, %c0_4] : memref<8x1xf32, #tpu.memory_space<vmem>>, vector<8x1xf32>
    %4 = vector.broadcast %3 : vector<8x1xf32> to vector<8x128xf32>
    %5 = arith.mulf %2, %4 : vector<8x128xf32>
    %c0_5 = arith.constant 0 : index
    %c0_6 = arith.constant 0 : index
    %6 = vector.load %arg6[%c0_5, %c0_6] : memref<1x128xf32, #tpu.memory_space<vmem>>, vector<1x128xf32>
    %7 = vector.broadcast %6 : vector<1x128xf32> to vector<8x128xf32>
    %8 = arith.mulf %5, %7 : vector<8x128xf32>
    %c0_7 = arith.constant 0 : index
    %c0_8 = arith.constant 0 : index
    %9 = vector.load %arg7[%c0_7, %c0_8] : memref<8x128xf32, #tpu.memory_space<vmem>>, vector<8x128xf32>
    tpu.vector_store %arg7[%c0_7, %c0_8], %8 {strides = array<i32>} : memref<8x128xf32, #tpu.memory_space<vmem>>, vector<8x128xf32>,
    return
  }
  func.func @transform_0(%arg0: i32, %arg1: i32, %arg2: i32) -> (i32, i32) {
    %c0_i32 = arith.constant 0 : i32
    return %arg0, %arg2 : i32, i32
  }
  func.func @transform_1(%arg0: i32, %arg1: i32, %arg2: i32) -> (i32, i32) {
    %c0_i32 = arith.constant 0 : i32
    return %arg1, %arg2 : i32, i32
  }
  func.func @transform_2(%arg0: i32, %arg1: i32, %arg2: i32) -> (i32, i32) {
    %c0_i32 = arith.constant 0 : i32
    %c0_i32_0 = arith.constant 0 : i32
    return %arg0, %c0_i32 : i32, i32
  }
  func.func @transform_3(%arg0: i32, %arg1: i32, %arg2: i32) -> (i32, i32) {
    %c0_i32 = arith.constant 0 : i32
    %c0_i32_0 = arith.constant 0 : i32
    return %c0_i32, %arg1 : i32, i32
  }
  func.func @transform_4(%arg0: i32, %arg1: i32, %arg2: i32) -> (i32, i32) {
    %c0_i32 = arith.constant 0 : i32
    return %arg0, %arg1 : i32, i32
  }
}

</mosaic_0001>

<llo_original>
// kernel: tpu_custom_call.1
$region0: #{tpu_custom_call.1}
  #allocation0 [shape = 'u32[]', space=smem, size = 0x4, offset = 0x4, fixed_abs, tag = 'smem constant byte address 0x4 - core index']
  #allocation1 [shape = 'u32[72,128]{1,0:T(1,128)}', space=vmem, size = 0x9000, scoped, tag = 'internal scratch']
  %s0 = inlined_call_operand.vmem [shape: f32[4,128], index: 0, kind: input, shape index: {}]
  %s1 = inlined_call_operand.hbm [shape: f32[8,128], index: 1, kind: input, shape index: {}]
  %s2 = inlined_call_operand.vmem [shape: f32[4,1], index: 2, kind: input, shape index: {}]
  %s3 = inlined_call_operand.vmem [shape: f32[1,8], index: 3, kind: input, shape index: {}]
  %s4 = inlined_call_operand.hbm [shape: f32[4,8], index: 4, kind: output, shape index: {}]
  %s5 = sld [smem:[#allocation0]]
  $region30: #{tpu_custom_call.1} parent=0
    _
  %s7 = ssub.s32 1, %s5
  %s8 = scalar_select 0, %s7, %s5
  $region1: #{tpu_custom_call.1} parent=0
    #allocation2 [shape = 'u8[65536]{0}', space=vmem, size = 0x10000, scoped, tag = 'input window, operand 1, single buffered']
    #allocation3 [shape = 's32[1]{0}', space=sflag, size = 0x4, scoped, tag = 'scoped memory for tpu_custom_call.1']
    #allocation4 [shape = 's32[1]{0}', space=sflag, size = 0x4, scoped, tag = 'scoped memory for tpu_custom_call.1']
    #allocation5 [shape = 'u8[4096]{0}', space=vmem, size = 0x1000, scoped, tag = 'output window, operand 0, single buffered']
    %9 = vsyncpa [#allocation3], 0
    %10 = vsyncpa [#allocation4], 0
    // Predicated region
    $region2: #{tpu_custom_call.1} parent=1 // pred_check
      _
    $region3: #{tpu_custom_call.1} parent=1 // pred_check_branch
      %12 = sbr.rel (0) target = $region5
    $region4: #{tpu_custom_call.1} parent=1 // pred_region
      _
    $region5: #{tpu_custom_call.1} parent=1 // pred_fallthru
      _
    // Predicated region
    $region6: #{tpu_custom_call.1} parent=1 // pred_check
      _
    $region7: #{tpu_custom_call.1} parent=1 // pred_check_branch
      %14 = sbr.rel (0) target = $region9
    $region8: #{tpu_custom_call.1} parent=1 // pred_region
      %16 = vsyncadd [#allocation3], 1920
      %s17 = sshll.u32 %s1, 4
      %s18 = int_to_ptr.hbm [resolvable:$true] %s17
      %s19 = sshll.u32 [#allocation2], 4
      %s20 = int_to_ptr.vmem [resolvable:$true] %s19
      %25 = dma.hbm_to_vmem [thread:$0]  %s18, 128, %s20, [#allocation3], 128, 128, 8
    $region9: #{tpu_custom_call.1} parent=1 // pred_fallthru
      _
    // Predicated region
    $region10: #{tpu_custom_call.1} parent=1 // pred_check
      _
    $region11: #{tpu_custom_call.1} parent=1 // pred_check_branch
      %27 = sbr.rel (0) target = $region13
    $region12: #{tpu_custom_call.1} parent=1 // pred_region
      _
    $region13: #{tpu_custom_call.1} parent=1 // pred_fallthru
      _
    // Predicated region
    $region14: #{tpu_custom_call.1} parent=1 // pred_check
      _
    $region15: #{tpu_custom_call.1} parent=1 // pred_check_branch
      %29 = sbr.rel (0) target = $region17
    $region16: #{tpu_custom_call.1} parent=1 // pred_region
      _
    $region17: #{tpu_custom_call.1} parent=1 // pred_fallthru
      _
    // Predicated region
    $region18: #{tpu_custom_call.1} parent=1 // pred_check
      _
    $region19: #{tpu_custom_call.1} parent=1 // pred_check_branch
      %31 = sbr.rel (0) target = $region21
    $region20: #{tpu_custom_call.1} parent=1 // pred_region
      %33 = dma.done [#allocation3], 2048
    $region21: #{tpu_custom_call.1} parent=1 // pred_fallthru
      _
    %v34 = vld [vmem:[%s0] sm:$0xff]
    %v35 = vld [vmem:[#allocation2] sm:$0xff]
    %v36 = vld [vmem:[#allocation2 + $0x8] sm:$0xff]
    %v37 = vld [vmem:[#allocation2 + $0x10] sm:$0xff]
    %v38 = vld [vmem:[#allocation2 + $0x18] sm:$0xff]
    %v39 = vld [vmem:[#allocation2 + $0x20] sm:$0xff]
    %v40 = vld [vmem:[#allocation2 + $0x28] sm:$0xff]
    %v41 = vld [vmem:[#allocation2 + $0x30] sm:$0xff]
    %v42 = vld [vmem:[#allocation2 + $0x38] sm:$0xff]
    %v43 = vld [vmem:[#allocation2 + $0x40] sm:$0xff]
    %v44 = vld [vmem:[#allocation2 + $0x48] sm:$0xff]
    %v45 = vld [vmem:[#allocation2 + $0x50] sm:$0xff]
    %v46 = vld [vmem:[#allocation2 + $0x58] sm:$0xff]
    %v47 = vld [vmem:[#allocation2 + $0x60] sm:$0xff]
    %v48 = vld [vmem:[#allocation2 + $0x68] sm:$0xff]
    %v49 = vld [vmem:[#allocation2 + $0x70] sm:$0xff]
    %v50 = vld [vmem:[#allocation2 + $0x78] sm:$0xff]
    %51 = vmatpush.xpose.msra.mxu0 %v50
    %52 = vmatpush.xpose.msra.mxu0 %v49
    %53 = vmatpush.xpose.msra.mxu0 %v48
    %54 = vmatpush.xpose.msra.mxu0 %v47
    %55 = vmatpush.xpose.msra.mxu0 %v46
    %56 = vmatpush.xpose.msra.mxu0 %v45
    %57 = vmatpush.xpose.msra.mxu0 %v44
    %58 = vmatpush.xpose.msra.mxu0 %v43
    %59 = vmatpush.xpose.msra.mxu0 %v42
    %60 = vmatpush.xpose.msra.mxu0 %v41
    %61 = vmatpush.xpose.msra.mxu0 %v40
    %62 = vmatpush.xpose.msra.mxu0 %v39
    %63 = vmatpush.xpose.msra.mxu0 %v38
    %64 = vmatpush.xpose.msra.mxu0 %v37
    %65 = vmatpush.xpose.msra.mxu0 %v36
    %66 = vmatpush.xpose.msra.mxu0 %v35
    %67 = vmatmul.f32.gmra.mxu0 %v34
    %v68 = vpop.f32.mrf.mxu0
    %v69 = vadd.f32 0.0, %v68
    %70 = vdwg.mxu0
    %v71 = vld [vmem:[%s2] sm:$0xff]
    %73 = vset.pattern.permute.xlu0 0
    %74 = vperm.xlu0 %73, %v71
    %v75 = vpop.permute.xlu0 %74
    %v77 = vmul.f32 %v69, %v75
    %v78 = vld [vmem:[%s3] sm:$0x1]
    %v80 = vperm.slane %v78, 0
    %v82 = vmul.f32 %v77, %v80
    %83 = vst [vmem:[#allocation5] sm:$0xff] %v82
    // Predicated region
    $region22: #{tpu_custom_call.1} parent=1 // pred_check
      _
    $region23: #{tpu_custom_call.1} parent=1 // pred_check_branch
      %85 = sbr.rel (0) target = $region25
    $region24: #{tpu_custom_call.1} parent=1 // pred_region
      %87 = vsyncadd [#allocation4], 64
      %s88 = sshll.u32 [#allocation5], 4
      %s89 = int_to_ptr.vmem [resolvable:$true] %s88
      %s90 = sshll.u32 %s4, 4
      %s91 = int_to_ptr.hbm [resolvable:$true] %s90
      %96 = dma.vmem_to_hbm [thread:$0]  %s89, 64, %s91, [#allocation4], 64, 64, 4
    $region25: #{tpu_custom_call.1} parent=1 // pred_fallthru
      _
    // Predicated region
    $region26: #{tpu_custom_call.1} parent=1 // pred_check
      _
    $region27: #{tpu_custom_call.1} parent=1 // pred_check_branch
      %98 = sbr.rel (0) target = $region29
    $region28: #{tpu_custom_call.1} parent=1 // pred_region
      %100 = dma.done [#allocation4], 128
    $region29: #{tpu_custom_call.1} parent=1 // pred_fallthru
      _
    %101 = vsyncpa [#allocation3], 1
    %102 = vsyncpa [#allocation4], 1

</llo_original>
